<compile_context>
chip_gen: v5e
topology: v5e:2x2
jax: 0.10.0
libtpu: 0.0.40
codegen_flags: <defaults>
</compile_context>

<pallas_src>
import jax
import jax.numpy as jnp
from jax.experimental import pallas as pl
from jax.experimental.pallas import tpu as pltpu


# Rows per grid step. Multiple of 256 (v6e/v7x MXU) and 128 (v5e). At 4096 the double-buffered,
# lane-padded f32 obs block is ~4 MiB and total kernel VMEM stays well inside the 32 MiB scoped
# limit on every generation (incl. v7x's 64 MiB physical). Sweep up to 8192-16384 with a larger
# vmem_limit_bytes if obs arrives as bf16.
_MAX_TILE_B = 4096
_VMEM_LIMIT_BYTES = 32 * 1024 * 1024


def _round_up(x, m):
    return ((x + m - 1) // m) * m


def _choose_tile_b(batch):
    padded = _round_up(max(int(batch), 1), 8)  # sublane alignment for the block batch dim
    if padded <= _MAX_TILE_B:
        return padded  # single-tile fast path (block == (padded, obs_dim))
    # Large batch: largest 256-aligned tile <= _MAX_TILE_B that keeps >= 2 grid steps so the
    # "parallel" batch axis can actually feed both TensorCores on v7x.
    num_tiles = max(2, pl.cdiv(padded, _MAX_TILE_B))
    return min(_round_up(pl.cdiv(padded, num_tiles), 256), _MAX_TILE_B)


def _critic_kernel(x_ref, w1_ref, b1_ref, w2_ref, b2_ref, w3_ref, b3_ref, o_ref):
    """One batch tile of the critic MLP.

    x:  (TB, obs_dim)  f32 or bf16 (bf16 preferred: halves streamed HBM bytes)
    w1: (obs_dim, h1) bf16,  b1: (1, h1) f32
    w2: (h1, h2)      bf16,  b2: (1, h2) f32
    w3: (1, h2)       f32,   b3: (1, 1)  f32
    o:  (1, TB)       f32    lane-dense row of per-example values
    """
    x = x_ref[...]
    if x.dtype != jnp.bfloat16:  # static at trace time; skipped when caller passes bf16 obs
        x = x.astype(jnp.bfloat16)

    # Layer 1: bf16 MXU matmul, f32 accumulation; bias + tanh in f32.
    h = jnp.dot(x, w1_ref[...], preferred_element_type=jnp.float32) + b1_ref[...]
    h = jnp.tanh(h)

    # Layer 2.
    h = jnp.dot(h.astype(jnp.bfloat16), w2_ref[...],
                preferred_element_type=jnp.float32) + b2_ref[...]
    h = jnp.tanh(h)

    # Layer 3 (out_features == 1): contract w3 (1, h2) with h (TB, h2) along the feature axis
    # -> (1, TB): values already lie along the lane axis for a dense, unmasked store.
    # TODO(synk): confirm via pl.lower_as_mlir that this last-vs-last contraction emits no
    # XLU transpose of h at large TILE_B; if it does, compare vs a VPU reduction.
    v = jax.lax.dot_general(
        w3_ref[...], h,
        dimension_numbers=(((1,), (1,)), ((), ())),
        preferred_element_type=jnp.float32,
    ) + b3_ref[...]
    o_ref[...] = v.astype(o_ref.dtype)


def _cost_estimate(batch, obs_dim, h1, h2, obs_itemsize, weight_bytes):
    return pl.CostEstimate(
        flops=2 * batch * (obs_dim * h1 + h1 * h2 + h2),
        transcendentals=batch * (h1 + h2),
        bytes_accessed=batch * obs_dim * obs_itemsize + batch * 4 + weight_bytes,
    )


def _weight_bytes(*arrs):
    return int(sum(a.size * a.dtype.itemsize for a in arrs))


def _tiled_call(obs, w1, b1, w2, b2, w3, b3, tile_b, num_tiles):
    """Pipelined call over the block-aligned prefix (num_tiles * tile_b rows) of obs."""
    obs_dim = obs.shape[1]
    h1, h2 = w1.shape[1], w2.shape[1]
    batch_cov = num_tiles * tile_b
    const = lambda i: (0, 0)  # same block every step -> weights stay VMEM-resident
    return pl.pallas_call(
        _critic_kernel,
        out_shape=jax.ShapeDtypeStruct((1, batch_cov), jnp.float32),
        grid=(num_tiles,),
        in_specs=[
            # obs is the only streamed operand; BlockSpec double-buffers its DMA.
            # Grid only touches blocks [0, num_tiles), so no OOB read of the ragged tail.
            pl.BlockSpec((tile_b, obs_dim), lambda i: (i, 0)),
            pl.BlockSpec(w1.shape, const),
            pl.BlockSpec(b1.shape, const),
            pl.BlockSpec(w2.shape, const),
            pl.BlockSpec(b2.shape, const),
            pl.BlockSpec(w3.shape, const),
            pl.BlockSpec(b3.shape, const),
        ],
        out_specs=pl.BlockSpec((1, tile_b), lambda i: (0, i)),
        compiler_params=pltpu.CompilerParams(
            dimension_semantics=("parallel",),      # shard batch tiles across TCs (v7x)
            vmem_limit_bytes=_VMEM_LIMIT_BYTES,
        ),
        cost_estimate=_cost_estimate(batch_cov, obs_dim, h1, h2,
                                     obs.dtype.itemsize,
                                     _weight_bytes(w1, b1, w2, b2, w3, b3)),
    )(obs, w1, b1, w2, b2, w3, b3)


def _single_call(obs_tail, w1, b1, w2, b2, w3, b3):
    """Single-block call for a ragged tail (< tile_b rows): blocks equal full array shapes,
    so no (8,128) alignment requirement and no padding copy."""
    rem, obs_dim = obs_tail.shape
    h1, h2 = w1.shape[1], w2.shape[1]
    return pl.pallas_call(
        _critic_kernel,
        out_shape=jax.ShapeDtypeStruct((1, rem), jnp.float32),
        compiler_params=pltpu.CompilerParams(vmem_limit_bytes=_VMEM_LIMIT_BYTES),
        cost_estimate=_cost_estimate(rem, obs_dim, h1, h2,
                                     obs_tail.dtype.itemsize,
                                     _weight_bytes(w1, b1, w2, b2, w3, b3)),
    )(obs_tail, w1, b1, w2, b2, w3, b3)


@jax.jit
def mlp_critic4safety_forward(obs, params):
    """obs: (B, obs_dim) float (f32 or bf16). Returns (B,) f32 == squeeze(v_net(obs), -1)."""
    w1, b1 = params["w1"], params["b1"]
    w2, b2 = params["w2"], params["b2"]
    w3, b3 = params["w3"], params["b3"]

    batch = obs.shape[0]
    tile_b = _choose_tile_b(batch)
    n_full = batch // tile_b
    rem = batch - n_full * tile_b

    pieces = []
    if n_full > 0:
        pieces.append(_tiled_call(obs, w1, b1, w2, b2, w3, b3, tile_b, n_full)[0])
    if rem > 0:
        # Tail slice is <= tile_b rows -- tiny compared to obs; replaces the old full jnp.pad copy.
        pieces.append(_single_call(obs[n_full * tile_b:], w1, b1, w2, b2, w3, b3)[0])
    return pieces[0] if len(pieces) == 1 else jnp.concatenate(pieces)


def init_params(key, obs_dim, hidden_sizes):
    """nn.Linear-style init: U(-1/sqrt(fan_in), 1/sqrt(fan_in)).

    Storage layout for the kernel:
      w1, w2: (in_features, out_features) bf16  (kernel computes x @ W == x @ W_torch.T)
      w3:     (1, h2) f32 row                   (last layer has out_features == 1)
      b1, b2: (1, out_features) f32;  b3: (1, 1) f32
    """
    sizes = [obs_dim] + list(hidden_sizes) + [1]
    raw = []
    for j in range(len(sizes) - 1):
        fan_in, fan_out = sizes[j], sizes[j + 1]
        key, kw, kb = jax.random.split(key, 3)
        bound = 1.0 / (fan_in ** 0.5)
        w = jax.random.uniform(kw, (fan_in, fan_out), jnp.float32, -bound, bound)
        b = jax.random.uniform(kb, (1, fan_out), jnp.float32, -bound, bound)
        raw.append((w, b))
    (w1, b1), (w2, b2), (w3, b3) = raw
    return {
        "w1": w1.astype(jnp.bfloat16), "b1": b1,
        "w2": w2.astype(jnp.bfloat16), "b2": b2,
        "w3": w3.reshape(1, -1), "b3": b3,
    }


def _reference_forward_f32(obs, params):
    h = jnp.tanh(obs.astype(jnp.float32) @ params["w1"].astype(jnp.float32) + params["b1"])
    h = jnp.tanh(h @ params["w2"].astype(jnp.float32) + params["b2"])
    return jnp.sum(h * params["w3"], axis=-1) + params["b3"][0, 0]


def _reference_forward_bf16(obs, params):
    x = obs.astype(jnp.bfloat16)
    h = jnp.tanh(jnp.dot(x, params["w1"],
                         preferred_element_type=jnp.float32) + params["b1"])
    h = jnp.tanh(jnp.dot(h.astype(jnp.bfloat16), params["w2"],
                         preferred_element_type=jnp.float32) + params["b2"])
    return jnp.sum(h * params["w3"], axis=-1) + params["b3"][0, 0]


if __name__ == "__main__":
    key = jax.random.PRNGKey(0)
    k_small, k_tiny, k_big, k_params = jax.random.split(key, 4)

    obs_dim, hidden_sizes = 16, (32, 32)
    params = init_params(k_params, obs_dim, hidden_sizes)

    # Small batch: single-tile main path (block == full array extents, no tail).
    obs_small = jax.random.normal(k_small, (8, obs_dim), jnp.float32)
    out_small = jax.block_until_ready(mlp_critic4safety_forward(obs_small, params))
    assert out_small.shape == (8,), out_small.shape

    # Tiny ragged batch (< 8 rows): exercises the tail-only, full-array-block path.
    obs_tiny = jax.random.normal(k_tiny, (3, obs_dim), jnp.float32)
    out_tiny = jax.block_until_ready(mlp_critic4safety_forward(obs_tiny, params))
    assert out_tiny.shape == (3,), out_tiny.shape

    # Larger ragged batch: tile_b=3072 -> tiled main call (grid=2) + 2856-row tail call.
    obs_big = jax.random.normal(k_big, (9000, obs_dim), jnp.float32)
    out_big = jax.block_until_ready(mlp_critic4safety_forward(obs_big, params))
    assert out_big.shape == (9000,), out_big.shape

    # bf16 obs path: in-kernel cast is skipped, results stay close to the f32-obs path.
    out_small_bf16 = jax.block_until_ready(
        mlp_critic4safety_forward(obs_small.astype(jnp.bfloat16), params))
    assert jnp.allclose(out_small_bf16, out_small, atol=3e-2, rtol=3e-2)

    for obs, out in ((obs_small, out_small), (obs_tiny, out_tiny), (obs_big, out_big)):
        ref_bf16 = _reference_forward_bf16(obs, params)  # matches kernel math
        ref_f32 = _reference_forward_f32(obs, params)    # full-precision reference
        assert jnp.allclose(out, ref_bf16, atol=2e-2, rtol=2e-2)
        assert jnp.allclose(out, ref_f32, atol=5e-2, rtol=5e-2)

    print("KERNEL_OK")
</pallas_src>

<mosaic_0001>
module attributes {stable_mosaic.version = 11 : i64} {
  func.func @_critic_kernel(%arg0: i32, %arg1: memref<8x16xf32, #tpu.memory_space<vmem>>, %arg2: memref<16x32xbf16, #tpu.memory_space<vmem>>, %arg3: memref<1x32xf32, #tpu.memory_space<vmem>>, %arg4: memref<32x32xbf16, #tpu.memory_space<vmem>>, %arg5: memref<1x32xf32, #tpu.memory_space<vmem>>, %arg6: memref<1x32xf32, #tpu.memory_space<vmem>>, %arg7: memref<1x1xf32, #tpu.memory_space<vmem>>, %arg8: memref<1x8xf32, #tpu.memory_space<vmem>>) attributes {dimension_semantics = [#tpu.dimension_semantics<parallel>], iteration_bounds = array<i64: 1>, scalar_prefetch = 0 : i64, scratch_operands = 0 : i64, tpu.core_type = #tpu.core_type<tc>, window_params = [{transform_indices = @transform_0, window_bounds = array<i64: 8, 16>}, {pipeline_mode = #tpu.pipeline_mode<synchronous>, transform_indices = @transform_1, window_bounds = array<i64: 16, 32>}, {pipeline_mode = #tpu.pipeline_mode<synchronous>, transform_indices = @transform_2, window_bounds = array<i64: 1, 32>}, {pipeline_mode = #tpu.pipeline_mode<synchronous>, transform_indices = @transform_3, window_bounds = array<i64: 32, 32>}, {pipeline_mode = #tpu.pipeline_mode<synchronous>, transform_indices = @transform_4, window_bounds = array<i64: 1, 32>}, {pipeline_mode = #tpu.pipeline_mode<synchronous>, transform_indices = @transform_5, window_bounds = array<i64: 1, 32>}, {pipeline_mode = #tpu.pipeline_mode<synchronous>, transform_indices = @transform_6, window_bounds = array<i64: 1, 1>}, {transform_indices = @transform_7, window_bounds = array<i64: 1, 8>}]} {
    %c0 = arith.constant 0 : index
    %c0_0 = arith.constant 0 : index
    %0 = vector.load %arg1[%c0, %c0_0] : memref<8x16xf32, #tpu.memory_space<vmem>>, vector<8x16xf32>
    %1 = arith.truncf %0 : vector<8x16xf32> to vector<8x16xbf16>
    %c0_1 = arith.constant 0 : index
    %c0_2 = arith.constant 0 : index
    %2 = vector.load %arg2[%c0_1, %c0_2] : memref<16x32xbf16, #tpu.memory_space<vmem>>, vector<16x32xbf16>
    %cst = arith.constant dense<0.000000e+00> : vector<8x32xf32>
    %3 = tpu.matmul %1, %2, %cst {dimension_numbers = #tpu.dot_dimension_numbers<[1], [0], [0], [1], [0, 0, 1, 1], [], []>} : vector<8x16xbf16>, vector<16x32xbf16>, vector<8x32xf32> -> vector<8x32xf32>
    %c0_3 = arith.constant 0 : index
    %c0_4 = arith.constant 0 : index
    %4 = vector.load %arg3[%c0_3, %c0_4] : memref<1x32xf32, #tpu.memory_space<vmem>>, vector<1x32xf32>
    %5 = vector.broadcast %4 : vector<1x32xf32> to vector<8x32xf32>
    %6 = arith.addf %3, %5 : vector<8x32xf32>
    %7 = math.tanh %6 : vector<8x32xf32>
    %8 = arith.truncf %7 : vector<8x32xf32> to vector<8x32xbf16>
    %c0_5 = arith.constant 0 : index
    %c0_6 = arith.constant 0 : index
    %9 = vector.load %arg4[%c0_5, %c0_6] : memref<32x32xbf16, #tpu.memory_space<vmem>>, vector<32x32xbf16>
    %cst_7 = arith.constant dense<0.000000e+00> : vector<8x32xf32>
    %10 = tpu.matmul %8, %9, %cst_7 {dimension_numbers = #tpu.dot_dimension_numbers<[1], [0], [0], [1], [0, 0, 1, 1], [], []>} : vector<8x32xbf16>, vector<32x32xbf16>, vector<8x32xf32> -> vector<8x32xf32>
    %c0_8 = arith.constant 0 : index
    %c0_9 = arith.constant 0 : index
    %11 = vector.load %arg5[%c0_8, %c0_9] : memref<1x32xf32, #tpu.memory_space<vmem>>, vector<1x32xf32>
    %12 = vector.broadcast %11 : vector<1x32xf32> to vector<8x32xf32>
    %13 = arith.addf %10, %12 : vector<8x32xf32>
    %14 = math.tanh %13 : vector<8x32xf32>
    %c0_10 = arith.constant 0 : index
    %c0_11 = arith.constant 0 : index
    %15 = vector.load %arg6[%c0_10, %c0_11] : memref<1x32xf32, #tpu.memory_space<vmem>>, vector<1x32xf32>
    %cst_12 = arith.constant dense<0.000000e+00> : vector<1x8xf32>
    %16 = tpu.matmul %15, %14, %cst_12 {dimension_numbers = #tpu.dot_dimension_numbers<[1], [1], [0], [0], [0, 0, 1, 0], [], []>} : vector<1x32xf32>, vector<8x32xf32>, vector<1x8xf32> -> vector<1x8xf32>
    %c0_13 = arith.constant 0 : index
    %c0_14 = arith.constant 0 : index
    %17 = vector.load %arg7[%c0_13, %c0_14] : memref<1x1xf32, #tpu.memory_space<vmem>>, vector<1x1xf32>
    %18 = vector.broadcast %17 : vector<1x1xf32> to vector<1x8xf32>
    %19 = arith.addf %16, %18 : vector<1x8xf32>
    %c0_15 = arith.constant 0 : index
    %c0_16 = arith.constant 0 : index
    %20 = vector.load %arg8[%c0_15, %c0_16] : memref<1x8xf32, #tpu.memory_space<vmem>>, vector<1x8xf32>
    tpu.vector_store %arg8[%c0_15, %c0_16], %19 {strides = array<i32>} : memref<1x8xf32, #tpu.memory_space<vmem>>, vector<1x8xf32>,
    return
  }
  func.func @transform_0(%arg0: i32) -> (i32, i32) {
    %c0_i32 = arith.constant 0 : i32
    %c0_i32_0 = arith.constant 0 : i32
    return %arg0, %c0_i32 : i32, i32
  }
  func.func @transform_1(%arg0: i32) -> (i32, i32) {
    %c0_i32 = arith.constant 0 : i32
    %c0_i32_0 = arith.constant 0 : i32
    %c0_i32_1 = arith.constant 0 : i32
    return %c0_i32, %c0_i32_0 : i32, i32
  }
  func.func @transform_2(%arg0: i32) -> (i32, i32) {
    %c0_i32 = arith.constant 0 : i32
    %c0_i32_0 = arith.constant 0 : i32
    %c0_i32_1 = arith.constant 0 : i32
    return %c0_i32, %c0_i32_0 : i32, i32
  }
  func.func @transform_3(%arg0: i32) -> (i32, i32) {
    %c0_i32 = arith.constant 0 : i32
    %c0_i32_0 = arith.constant 0 : i32
    %c0_i32_1 = arith.constant 0 : i32
    return %c0_i32, %c0_i32_0 : i32, i32
  }
  func.func @transform_4(%arg0: i32) -> (i32, i32) {
    %c0_i32 = arith.constant 0 : i32
    %c0_i32_0 = arith.constant 0 : i32
    %c0_i32_1 = arith.constant 0 : i32
    return %c0_i32, %c0_i32_0 : i32, i32
  }
  func.func @transform_5(%arg0: i32) -> (i32, i32) {
    %c0_i32 = arith.constant 0 : i32
    %c0_i32_0 = arith.constant 0 : i32
    %c0_i32_1 = arith.constant 0 : i32
    return %c0_i32, %c0_i32_0 : i32, i32
  }
  func.func @transform_6(%arg0: i32) -> (i32, i32) {
    %c0_i32 = arith.constant 0 : i32
    %c0_i32_0 = arith.constant 0 : i32
    %c0_i32_1 = arith.constant 0 : i32
    return %c0_i32, %c0_i32_0 : i32, i32
  }
  func.func @transform_7(%arg0: i32) -> (i32, i32) {
    %c0_i32 = arith.constant 0 : i32
    %c0_i32_0 = arith.constant 0 : i32
    return %c0_i32, %arg0 : i32, i32
  }
}

</mosaic_0001>

<llo_original>
// kernel: mlp_critic4safety_forward.1
$region0: #{mlp_critic4safety_forward.1}
  #allocation0 [shape = 'u32[]', space=smem, size = 0x4, offset = 0x4, fixed_abs, tag = 'smem constant byte address 0x4 - core index']
  #allocation1 [shape = 'u32[72,128]{1,0:T(1,128)}', space=vmem, size = 0x9000, scoped, tag = 'internal scratch']
  #allocation2 [shape = 'f32[1,1]{1,0:T(1,128)S(1)}', space=vmem, size = 0x200, scoped, tag = 'scoped memory for mlp_critic4safety_forward.1']
  %s0 = inlined_call_operand.hbm [shape: f32[8,16], index: 0, kind: input, shape index: {}]
  %s1 = inlined_call_operand.hbm [shape: bf16[16,32], index: 1, kind: input, shape index: {}]
  %s2 = inlined_call_operand.vmem [shape: f32[1,32], index: 2, kind: input, shape index: {}]
  %s3 = inlined_call_operand.hbm [shape: bf16[32,32], index: 3, kind: input, shape index: {}]
  %s4 = inlined_call_operand.vmem [shape: f32[1,32], index: 4, kind: input, shape index: {}]
  %s5 = inlined_call_operand.vmem [shape: f32[1,32], index: 5, kind: input, shape index: {}]
  %s6 = inlined_call_operand.<no memory space> [shape: f32[1,1], index: 6, kind: input, shape index: {}]
  %s7 = inlined_call_operand.hbm [shape: f32[1,8], index: 7, kind: output, shape index: {}]
  %s8 = sld [smem:[#allocation0]]
  $region50: #{mlp_critic4safety_forward.1} parent=0
    _
  %s10 = ssub.s32 1, %s8
  %s11 = scalar_select 0, %s10, %s8
  %v12 = vstv %s6
  %13 = vst [vmem:[#allocation2] sm:$0x1] %v12
  $region1: #{mlp_critic4safety_forward.1} parent=0
    #allocation3 [shape = 'u8[4096]{0}', space=vmem, size = 0x1000, scoped, tag = 'input window, operand 0, single buffered']
    #allocation4 [shape = 's32[1]{0}', space=sflag, size = 0x4, scoped, tag = 'scoped memory for mlp_critic4safety_forward.1']
    #allocation5 [shape = 's32[1]{0}', space=sflag, size = 0x4, scoped, tag = 'scoped memory for mlp_critic4safety_forward.1']
    #allocation6 [shape = 'u8[4096]{0}', space=vmem, size = 0x1000, scoped, tag = 'input window, operand 1, single buffered']
    #allocation7 [shape = 's32[1]{0}', space=sflag, size = 0x4, scoped, tag = 'scoped memory for mlp_critic4safety_forward.1']
    #allocation8 [shape = 'u8[8192]{0}', space=vmem, size = 0x2000, scoped, tag = 'input window, operand 3, single buffered']
    #allocation9 [shape = 'u8[512]{0}', space=vmem, size = 0x400, scoped, tag = 'output window, operand 0, single buffered']
    %14 = vsyncpa [#allocation4], 0
    %15 = vsyncpa [#allocation7], 0
    %16 = vsyncpa [#allocation5], 0
    // Predicated region
    $region2: #{mlp_critic4safety_forward.1} parent=1 // pred_check
      _
    $region3: #{mlp_critic4safety_forward.1} parent=1 // pred_check_branch
      %18 = sbr.rel (0) target = $region5
    $region4: #{mlp_critic4safety_forward.1} parent=1 // pred_region
      %20 = vsyncadd [#allocation4], 0
      %s22 = sshll.u32 %s0, 4
      %s23 = int_to_ptr.hbm [resolvable:$true] %s22
      %s24 = sshll.u32 [#allocation3], 4
      %s25 = int_to_ptr.vmem [resolvable:$true] %s24
      %27 = dma.hbm_to_vmem [thread:$0]  %s23, 128, %s25, [#allocation4]
    $region5: #{mlp_critic4safety_forward.1} parent=1 // pred_fallthru
      _
    // Predicated region
    $region6: #{mlp_critic4safety_forward.1} parent=1 // pred_check
      _
    $region7: #{mlp_critic4safety_forward.1} parent=1 // pred_check_branch
      %29 = sbr.rel (0) target = $region9
    $region8: #{mlp_critic4safety_forward.1} parent=1 // pred_region
      %31 = vsyncadd [#allocation7], 0
      %s32 = sshll.u32 %s1, 4
      %s33 = int_to_ptr.hbm [resolvable:$true] %s32
      %s34 = sshll.u32 [#allocation6], 4
      %s35 = int_to_ptr.vmem [resolvable:$true] %s34
      %40 = dma.hbm_to_vmem [thread:$0]  %s33, 128, %s35, [#allocation7], 64, 64, 4
    $region9: #{mlp_critic4safety_forward.1} parent=1 // pred_fallthru
      _
    // Predicated region
    $region10: #{mlp_critic4safety_forward.1} parent=1 // pred_check
      _
    $region11: #{mlp_critic4safety_forward.1} parent=1 // pred_check_branch
      %42 = sbr.rel (0) target = $region13
    $region12: #{mlp_critic4safety_forward.1} parent=1 // pred_region
      _
    $region13: #{mlp_critic4safety_forward.1} parent=1 // pred_fallthru
      _
    // Predicated region
    $region14: #{mlp_critic4safety_forward.1} parent=1 // pred_check
      _
    $region15: #{mlp_critic4safety_forward.1} parent=1 // pred_check_branch
      %44 = sbr.rel (0) target = $region17
    $region16: #{mlp_critic4safety_forward.1} parent=1 // pred_region
      %46 = vsyncadd [#allocation7], 0
      %s47 = sshll.u32 %s3, 4
      %s48 = int_to_ptr.hbm [resolvable:$true] %s47
      %s49 = sshll.u32 [#allocation8], 4
      %s50 = int_to_ptr.vmem [resolvable:$true] %s49
      %55 = dma.hbm_to_vmem [thread:$0]  %s48, 256, %s50, [#allocation7], 64, 64, 4
    $region17: #{mlp_critic4safety_forward.1} parent=1 // pred_fallthru
      _
    // Predicated region
    $region18: #{mlp_critic4safety_forward.1} parent=1 // pred_check
      _
    $region19: #{mlp_critic4safety_forward.1} parent=1 // pred_check_branch
      %57 = sbr.rel (0) target = $region21
    $region20: #{mlp_critic4safety_forward.1} parent=1 // pred_region
      _
    $region21: #{mlp_critic4safety_forward.1} parent=1 // pred_fallthru
      _
    // Predicated region
    $region22: #{mlp_critic4safety_forward.1} parent=1 // pred_check
      _
    $region23: #{mlp_critic4safety_forward.1} parent=1 // pred_check_branch
      %59 = sbr.rel (0) target = $region25
    $region24: #{mlp_critic4safety_forward.1} parent=1 // pred_region
      _
    $region25: #{mlp_critic4safety_forward.1} parent=1 // pred_fallthru
      _
    // Predicated region
    $region26: #{mlp_critic4safety_forward.1} parent=1 // pred_check
      _
    $region27: #{mlp_critic4safety_forward.1} parent=1 // pred_check_branch
      %61 = sbr.rel (0) target = $region29
    $region28: #{mlp_critic4safety_forward.1} parent=1 // pred_region
      _
    $region29: #{mlp_critic4safety_forward.1} parent=1 // pred_fallthru
      _
    // Predicated region
    $region30: #{mlp_critic4safety_forward.1} parent=1 // pred_check
      _
    $region31: #{mlp_critic4safety_forward.1} parent=1 // pred_check_branch
      %63 = sbr.rel (0) target = $region33
    $region32: #{mlp_critic4safety_forward.1} parent=1 // pred_region
      %65 = dma.done [#allocation4], 128
    $region33: #{mlp_critic4safety_forward.1} parent=1 // pred_fallthru
      _
    // Predicated region
    $region34: #{mlp_critic4safety_forward.1} parent=1 // pred_check
      _
    $region35: #{mlp_critic4safety_forward.1} parent=1 // pred_check_branch
      %67 = sbr.rel (0) target = $region37
    $region36: #{mlp_critic4safety_forward.1} parent=1 // pred_region
      %69 = dma.done [#allocation7], 128
    $region37: #{mlp_critic4safety_forward.1} parent=1 // pred_fallthru
      _
    // Predicated region
    $region38: #{mlp_critic4safety_forward.1} parent=1 // pred_check
      _
    $region39: #{mlp_critic4safety_forward.1} parent=1 // pred_check_branch
      %71 = sbr.rel (0) target = $region41
    $region40: #{mlp_critic4safety_forward.1} parent=1 // pred_region
      %73 = dma.done [#allocation7], 256
    $region41: #{mlp_critic4safety_forward.1} parent=1 // pred_fallthru
      _
    %v75 = vld [vmem:[#allocation3] sm:$0xff]
    %v76 = vpack.c.bf16 %v75, %v75
    %v77 = vld [vmem:[#allocation6] sm:$0xf]
    %v78 = vld [vmem:[#allocation6 + $0x4] sm:$0xf]
    %v79 = vld [vmem:[%s2] sm:$0x1]
    %v81 = vperm.slane %v79, 0
    %v85 = vunpack.c.l.b16 %v77
    %v86 = vunpack.c.l.b16 %v78
    %v87 = vpack.c.b16 %v86, %v85
    %vm89 = vcmask 130048
    %v91 = vsel %vm89, %v76, 0
    %93 = vmatpush.bf16.msra.mxu0 0
    %94 = vmatpush.bf16.msra.mxu0 0
    %95 = vmatpush.bf16.msra.mxu0 0
    %96 = vmatpush.bf16.msra.mxu0 0
    %97 = vmatpush.bf16.msra.mxu0 0
    %98 = vmatpush.bf16.msra.mxu0 0
    %99 = vmatpush.bf16.msra.mxu0 0
    %100 = vmatpush.bf16.msra.mxu0 %v87
    %101 = vmatmul.bf16.gmra.mxu0 %v91
    %v102 = vpop.f32.mrf.mxu0
    %v103 = vadd.f32 %v81, %v102
    %v104 = vpop.f32.mrf.mxu0
    %105 = vdwg.mxu0
    %v106 = vtanh.pop %v103
    %v107 = vpack.c.bf16 %v106, %v106
    %v108 = vld [vmem:[#allocation8] sm:$0xf]
    %v109 = vld [vmem:[#allocation8 + $0x4] sm:$0xf]
    %v110 = vld [vmem:[#allocation8 + $0x8] sm:$0xf]
    %v111 = vld [vmem:[#allocation8 + $0xc] sm:$0xf]
    %v112 = vld [vmem:[%s4] sm:$0x1]
    %v114 = vperm.slane %v112, 0
    %v120 = vunpack.c.l.b16 %v108
    %v121 = vunpack.c.l.b16 %v109
    %v122 = vunpack.c.l.b16 %v110
    %v123 = vunpack.c.l.b16 %v111
    %v124 = vpack.c.b16 %v121, %v120
    %v125 = vpack.c.b16 %v123, %v122
    %vm128 = vcmask 261120
    %v130 = vsel %vm128, %v107, 0
    %132 = vmatpush.bf16.msra.mxu0 0
    %133 = vmatpush.bf16.msra.mxu0 0
    %134 = vmatpush.bf16.msra.mxu0 0
    %135 = vmatpush.bf16.msra.mxu0 0
    %136 = vmatpush.bf16.msra.mxu0 0
    %137 = vmatpush.bf16.msra.mxu0 0
    %138 = vmatpush.bf16.msra.mxu0 %v125
    %139 = vmatpush.bf16.msra.mxu0 %v124
    %140 = vmatmul.bf16.gmra.mxu0 %v130
    %v141 = vpop.f32.mrf.mxu0
    %v142 = vadd.f32 %v114, %v141
    %v143 = vpop.f32.mrf.mxu0
    %144 = vdwg.mxu0
    %v145 = vtanh.pop %v142
    %v146 = vld [vmem:[%s5] sm:$0x1]
    %v147 = vld [vmem:[#allocation2] sm:$0x1]
    %149 = vset.pattern.permute.xlu0 0
    %150 = vperm.xlu0 %149, %v147
    %v151 = vpop.permute.xlu0 %150
    %v153 = vperm.slane %v151, 0
    %v155 = vsel %vm128, %v146, 0
    %v158 = vsel %vm128, %v145, 0
    %160 = vmatpush.xpose.msra.mxu0 0.0
    %161 = vmatpush.xpose.msra.mxu0 0.0
    %162 = vmatpush.xpose.msra.mxu0 0.0
    %163 = vmatpush.xpose.msra.mxu0 0.0
    %164 = vmatpush.xpose.msra.mxu0 0.0
    %165 = vmatpush.xpose.msra.mxu0 0.0
    %166 = vmatpush.xpose.msra.mxu0 0.0
    %167 = vmatpush.xpose.msra.mxu0 0.0
    %168 = vmatpush.xpose.msra.mxu0 0.0
    %169 = vmatpush.xpose.msra.mxu0 0.0
    %170 = vmatpush.xpose.msra.mxu0 0.0
    %171 = vmatpush.xpose.msra.mxu0 0.0
    %172 = vmatpush.xpose.msra.mxu0 0.0
    %173 = vmatpush.xpose.msra.mxu0 0.0
    %174 = vmatpush.xpose.msra.mxu0 0.0
    %175 = vmatpush.xpose.msra.mxu0 %v158
    %176 = vmatmul.f32.gmra.mxu0 %v155
    %v177 = vpop.f32.mrf.mxu0
    %v178 = vadd.f32 %v153, %v177
    %179 = vdwg.mxu0
    %vm180 = vcmask 57344
    %181 = vst.msk [vmem:[#allocation9] sm:$0x1] %vm180, %v178
    // Predicated region
    $region42: #{mlp_critic4safety_forward.1} parent=1 // pred_check
      _
    $region43: #{mlp_critic4safety_forward.1} parent=1 // pred_check_branch
      %183 = sbr.rel (0) target = $region45
    $region44: #{mlp_critic4safety_forward.1} parent=1 // pred_region
      %185 = vsyncadd [#allocation5], 0
      %s187 = sshll.u32 [#allocation9], 4
      %s188 = int_to_ptr.vmem [resolvable:$true] %s187
      %s189 = sshll.u32 %s7, 4
      %s190 = int_to_ptr.hbm [resolvable:$true] %s189
      %192 = dma.vmem_to_hbm [thread:$0]  %s188, 16, %s190, [#allocation5]
    $region45: #{mlp_critic4safety_forward.1} parent=1 // pred_fallthru
      _
    // Predicated region
    $region46: #{mlp_critic4safety_forward.1} parent=1 // pred_check
      _
    $region47: #{mlp_critic4safety_forward.1} parent=1 // pred_check_branch
      %194 = sbr.rel (0) target = $region49
    $region48: #{mlp_critic4safety_forward.1} parent=1 // pred_region
      %196 = dma.done [#allocation5], 16
    $region49: #{mlp_critic4safety_forward.1} parent=1 // pred_fallthru
      _
    %197 = vsyncpa [#allocation4], 1
    %198 = vsyncpa [#allocation7], 1
    %199 = vsyncpa [#allocation5], 1

</llo_original>
